<compile_context>
chip_gen: v7x
topology: tpu7x:2x2x1
jax: 0.10.0
libtpu: 0.0.40
codegen_flags: <defaults>
</compile_context>

<pallas_src>
import functools

import jax
import jax.numpy as jnp
from jax.experimental import pallas as pl
from jax.experimental.pallas import tpu as pltpu


_TARGET_BLOCK_BYTES = 6 * 1024 * 1024  # ~6 MiB input tile -> ~12 MiB double-buffered


def _round_up(x, m):
    return ((x + m - 1) // m) * m


def _round_down(x, m):
    return (x // m) * m


def _concat_pool_reference(x):
    """Plain-JAX reference / small-map fallback (same semantics as the module)."""
    mp = jnp.max(x, axis=(2, 3), keepdims=True)
    ap = jnp.mean(x, axis=(2, 3), keepdims=True)
    return jnp.concatenate([mp, ap], axis=1)


def _concat_pool_kernel(x_ref, out_ref, max_acc, sum_acc, *,
                        hw_true, block_hw, mask_hw):
    """Grid = (nc_tiles, hw_tiles); hw axis is the (innermost) reduction axis."""
    k = pl.program_id(1)

    @pl.when(k == 0)
    def _init():
        max_acc[...] = jnp.full_like(max_acc, -jnp.inf)
        sum_acc[...] = jnp.zeros_like(sum_acc)

    x = x_ref[...].astype(jnp.float32)  # (block_nc, block_hw)

    if mask_hw:
        # Last HW tile is partial: mask padded lanes (-inf for max, 0 for sum).
        col = jax.lax.broadcasted_iota(jnp.int32, x.shape, 1) + k * block_hw
        valid = col < hw_true
        x_max = jnp.where(valid, x, -jnp.inf)
        x_sum = jnp.where(valid, x, 0.0)
    else:
        x_max = x
        x_sum = x

    max_acc[...] = jnp.maximum(max_acc[...], jnp.max(x_max, axis=-1, keepdims=True))
    sum_acc[...] = sum_acc[...] + jnp.sum(x_sum, axis=-1, keepdims=True)

    @pl.when(k == pl.num_programs(1) - 1)
    def _finalize():
        out_ref[:, 0:1] = max_acc[...].astype(out_ref.dtype)
        # Divide by the TRUE spatial size, not the (possibly padded) block width.
        out_ref[:, 1:2] = (sum_acc[...] * (1.0 / hw_true)).astype(out_ref.dtype)


def _default_blocks(nc, hw, itemsize):
    """Pick tile sizes ~_TARGET_BLOCK_BYTES; generation-safe VMEM budget."""
    target_elems = max(_TARGET_BLOCK_BYTES // itemsize, 1024)
    sub = max(8, 32 // itemsize)  # sublane granularity (8 f32, 16 bf16, ...)
    hw_cap = max(128, _round_down(target_elems // sub, 128))
    if hw <= hw_cap:
        block_hw = hw                      # full spatial extent per tile
        block_nc = max(sub, _round_down(target_elems // max(hw, 1), sub))
    else:
        block_hw = hw_cap                  # tile HW (multiple of 128)
        block_nc = sub
    return block_nc, block_hw


def _sanitize(block, dim, granule):
    block = min(block, dim)
    if block < dim:
        block = max(granule, _round_down(block, granule))
    return block


def adaptive_concat_pool2d(x, *, block_nc=None, block_hw=None):
    """Equivalent of AdaptiveConcatPool2d(sz=(1,1)).forward(x) for NCHW input."""
    # TODO(synk): general adaptive output sizes sz != (1,1) not implemented.
    N, C, H, W = x.shape
    NC, HW = N * C, H * W

    # Tiny feature maps: lane axis under-utilized, per-step overhead dominates;
    # fused XLA reductions are as fast or faster.
    if HW < 128:
        return _concat_pool_reference(x)

    itemsize = jnp.dtype(x.dtype).itemsize
    d_nc, d_hw = _default_blocks(NC, HW, itemsize)
    block_nc = d_nc if block_nc is None else block_nc
    block_hw = d_hw if block_hw is None else block_hw
    sub = max(8, 32 // itemsize)
    block_nc = _sanitize(block_nc, NC, sub)
    block_hw = _sanitize(block_hw, HW, 128)

    num_nc = pl.cdiv(NC, block_nc)
    num_hw = pl.cdiv(HW, block_hw)
    mask_hw = (HW % block_hw) != 0

    xf = x.reshape(NC, HW)

    kernel = functools.partial(
        _concat_pool_kernel, hw_true=HW, block_hw=block_hw, mask_hw=mask_hw)

    out = pl.pallas_call(
        kernel,
        out_shape=jax.ShapeDtypeStruct((NC, 2), x.dtype),
        grid=(num_nc, num_hw),
        in_specs=[pl.BlockSpec((block_nc, block_hw), lambda i, k: (i, k))],
        out_specs=pl.BlockSpec((block_nc, 2), lambda i, k: (i, 0)),
        scratch_shapes=[
            pltpu.VMEM((block_nc, 1), jnp.float32),  # running max
            pltpu.VMEM((block_nc, 1), jnp.float32),  # running sum
        ],
        compiler_params=pltpu.CompilerParams(
            # NC tiles are independent -> "parallel" (shards across v7x's 2 TCs);
            # HW is the reduction axis -> "arbitrary", last.
            dimension_semantics=("parallel", "arbitrary"),
        ),
    )(xf)

    mp = out[:, 0].reshape(N, C, 1, 1)
    ap = out[:, 1].reshape(N, C, 1, 1)
    # torch.cat([self.mp(x), self.ap(x)], dim=1)  (tiny op: 2*N*C elements)
    return jnp.concatenate([mp, ap], axis=1)


if __name__ == "__main__":
    key = jax.random.PRNGKey(0)
    k1, k2 = jax.random.split(key)

    # Case 1: module-spec shape; single-tile grid (HW fits one block).
    x1 = jax.random.normal(k1, (2, 4, 16, 16), dtype=jnp.float32)
    out1 = adaptive_concat_pool2d(x1)
    jax.block_until_ready(out1)
    ref1 = _concat_pool_reference(x1)
    assert out1.shape == (2, 8, 1, 1), out1.shape
    assert jnp.allclose(out1, ref1, atol=1e-5, rtol=1e-5)

    # Case 2: odd sizes with explicit small tiles -> exercises multi-tile NC grid,
    # partial (masked) HW tiles and the running-accumulator path.
    x2 = jax.random.normal(k2, (3, 24, 23, 31), dtype=jnp.float32)
    out2 = adaptive_concat_pool2d(x2, block_nc=16, block_hw=256)
    jax.block_until_ready(out2)
    ref2 = _concat_pool_reference(x2)
    assert out2.shape == (3, 48, 1, 1), out2.shape
    assert jnp.allclose(out2, ref2, atol=1e-5, rtol=1e-5)

    print("KERNEL_OK")
</pallas_src>

<mosaic_0001>
module attributes {stable_mosaic.version = 11 : i64} {
  func.func @_concat_pool_kernel(%arg0: i32, %arg1: i32, %arg2: memref<8x256xf32, #tpu.memory_space<vmem>>, %arg3: memref<8x2xf32, #tpu.memory_space<vmem>>, %arg4: memref<8x1xf32, #tpu.memory_space<vmem>>, %arg5: memref<8x1xf32, #tpu.memory_space<vmem>>) attributes {dimension_semantics = [#tpu.dimension_semantics<parallel>, #tpu.dimension_semantics<arbitrary>], iteration_bounds = array<i64: 1, 1>, scalar_prefetch = 0 : i64, scratch_operands = 2 : i64, tpu.core_type = #tpu.core_type<tc>, window_params = [{transform_indices = @transform_0, window_bounds = array<i64: 8, 256>}, {transform_indices = @transform_1, window_bounds = array<i64: 8, 2>}]} {
    %c0_i32 = arith.constant 0 : i32
    %0 = arith.cmpi eq, %arg1, %c0_i32 : i32
    %1 = arith.extui %0 : i1 to i32
    %c0_i32_0 = arith.constant 0 : i32
    %2 = arith.cmpi ne, %1, %c0_i32_0 : i32
    scf.if %2 {
      %cst_13 = arith.constant 0xFF800000 : f32
      %17 = vector.broadcast %cst_13 : f32 to vector<8x1xf32>
      %c0_14 = arith.constant 0 : index
      %c0_15 = arith.constant 0 : index
      %18 = vector.load %arg4[%c0_14, %c0_15] : memref<8x1xf32, #tpu.memory_space<vmem>>, vector<8x1xf32>
      tpu.vector_store %arg4[%c0_14, %c0_15], %17 {strides = array<i32>} : memref<8x1xf32, #tpu.memory_space<vmem>>, vector<8x1xf32>,
      %cst_16 = arith.constant 0.000000e+00 : f32
      %19 = vector.broadcast %cst_16 : f32 to vector<8x1xf32>
      %c0_17 = arith.constant 0 : index
      %c0_18 = arith.constant 0 : index
      %20 = vector.load %arg5[%c0_17, %c0_18] : memref<8x1xf32, #tpu.memory_space<vmem>>, vector<8x1xf32>
      tpu.vector_store %arg5[%c0_17, %c0_18], %19 {strides = array<i32>} : memref<8x1xf32, #tpu.memory_space<vmem>>, vector<8x1xf32>,
    } else {
    }
    %c0 = arith.constant 0 : index
    %c0_1 = arith.constant 0 : index
    %3 = vector.load %arg2[%c0, %c0_1] : memref<8x256xf32, #tpu.memory_space<vmem>>, vector<8x256xf32>
    %c0_2 = arith.constant 0 : index
    %c0_3 = arith.constant 0 : index
    %4 = vector.load %arg4[%c0_2, %c0_3] : memref<8x1xf32, #tpu.memory_space<vmem>>, vector<8x1xf32>
    %cst = arith.constant dense<0xFF800000> : vector<8xf32>
    %5 = vector.multi_reduction <maximumf>, %3, %cst [1] : vector<8x256xf32> to vector<8xf32>
    %6 = vector.shape_cast %5 : vector<8xf32> to vector<8x1xf32>
    %7 = arith.maximumf %4, %6 : vector<8x1xf32>
    %c0_4 = arith.constant 0 : index
    %c0_5 = arith.constant 0 : index
    %8 = vector.load %arg4[%c0_4, %c0_5] : memref<8x1xf32, #tpu.memory_space<vmem>>, vector<8x1xf32>
    tpu.vector_store %arg4[%c0_4, %c0_5], %7 {strides = array<i32>} : memref<8x1xf32, #tpu.memory_space<vmem>>, vector<8x1xf32>,
    %c0_6 = arith.constant 0 : index
    %c0_7 = arith.constant 0 : index
    %9 = vector.load %arg5[%c0_6, %c0_7] : memref<8x1xf32, #tpu.memory_space<vmem>>, vector<8x1xf32>
    %cst_8 = arith.constant dense<0.000000e+00> : vector<8xf32>
    %10 = vector.multi_reduction <add>, %3, %cst_8 [1] : vector<8x256xf32> to vector<8xf32>
    %11 = vector.shape_cast %10 : vector<8xf32> to vector<8x1xf32>
    %12 = arith.addf %9, %11 : vector<8x1xf32>
    %c0_9 = arith.constant 0 : index
    %c0_10 = arith.constant 0 : index
    %13 = vector.load %arg5[%c0_9, %c0_10] : memref<8x1xf32, #tpu.memory_space<vmem>>, vector<8x1xf32>
    tpu.vector_store %arg5[%c0_9, %c0_10], %12 {strides = array<i32>} : memref<8x1xf32, #tpu.memory_space<vmem>>, vector<8x1xf32>,
    %c0_i32_11 = arith.constant 0 : i32
    %14 = arith.cmpi eq, %arg1, %c0_i32_11 : i32
    %15 = arith.extui %14 : i1 to i32
    %c0_i32_12 = arith.constant 0 : i32
    %16 = arith.cmpi ne, %15, %c0_i32_12 : i32
    scf.if %16 {
      %c0_13 = arith.constant 0 : index
      %c0_14 = arith.constant 0 : index
      %17 = vector.load %arg4[%c0_13, %c0_14] : memref<8x1xf32, #tpu.memory_space<vmem>>, vector<8x1xf32>
      %c0_15 = arith.constant 0 : index
      %c0_16 = arith.constant 0 : index
      %18 = vector.load %arg3[%c0_15, %c0_16] : memref<8x2xf32, #tpu.memory_space<vmem>>, vector<8x1xf32>
      tpu.vector_store %arg3[%c0_15, %c0_16], %17 {strides = array<i32>} : memref<8x2xf32, #tpu.memory_space<vmem>>, vector<8x1xf32>,
      %c0_17 = arith.constant 0 : index
      %c0_18 = arith.constant 0 : index
      %19 = vector.load %arg5[%c0_17, %c0_18] : memref<8x1xf32, #tpu.memory_space<vmem>>, vector<8x1xf32>
      %cst_19 = arith.constant 3.906250e-03 : f32
      %20 = vector.broadcast %cst_19 : f32 to vector<8x1xf32>
      %21 = arith.mulf %19, %20 : vector<8x1xf32>
      %c0_20 = arith.constant 0 : index
      %c1 = arith.constant 1 : index
      %22 = vector.load %arg3[%c0_20, %c1] : memref<8x2xf32, #tpu.memory_space<vmem>>, vector<8x1xf32>
      tpu.vector_store %arg3[%c0_20, %c1], %21 {strides = array<i32>} : memref<8x2xf32, #tpu.memory_space<vmem>>, vector<8x1xf32>,
    } else {
    }
    return
  }
  func.func @transform_0(%arg0: i32, %arg1: i32) -> (i32, i32) {
    %c0_i32 = arith.constant 0 : i32
    return %arg0, %arg1 : i32, i32
  }
  func.func @transform_1(%arg0: i32, %arg1: i32) -> (i32, i32) {
    %c0_i32 = arith.constant 0 : i32
    %c0_i32_0 = arith.constant 0 : i32
    return %arg0, %c0_i32 : i32, i32
  }
}

</mosaic_0001>

<llo_original>
// kernel: tpu_custom_call.1
$region0: #{tpu_custom_call.1}
  #allocation0 [shape = 'u32[]', space=smem, size = 0x4, offset = 0x4, fixed_abs, tag = 'smem constant byte address 0x4 - core index']
  #allocation1 [shape = 'u32[144,128]{1,0:T(1,128)}', space=vmem, size = 0x12000, scoped, tag = 'internal scratch']
  #allocation2 [shape = 'f32[8,1]{1,0:T(8,128)}', space=vmem, size = 0x1000, scoped, tag = 'scratch operand']
  #allocation3 [shape = 'f32[8,1]{1,0:T(8,128)}', space=vmem, size = 0x1000, scoped, tag = 'scratch operand']
  %s0 = inlined_call_operand.hbm [shape: f32[8,256], index: 0, kind: input, shape index: {}]
  %s1 = inlined_call_operand.vmem [shape: f32[8,2], index: 1, kind: output, shape index: {}]
  %s2 = sld [smem:[#allocation0]]
  $region26: #{tpu_custom_call.1} parent=0
    _
  %s4 = ssub.s32 1, %s2
  %s5 = scalar_select 0, %s4, %s2
  $region1: #{tpu_custom_call.1} parent=0
    #allocation4 [shape = 'u8[8192]{0}', space=vmem, size = 0x2000, scoped, tag = 'input window, operand 0, single buffered']
    #allocation5 [shape = 's32[1]{0}', space=sflag, size = 0x4, scoped, tag = 'scoped memory for tpu_custom_call.1']
    %6 = vsyncpa [#allocation5], 0
    // Predicated region
    $region2: #{tpu_custom_call.1} parent=1 // pred_check
      _
    $region3: #{tpu_custom_call.1} parent=1 // pred_check_branch
      %8 = sbr.rel (0) target = $region5
    $region4: #{tpu_custom_call.1} parent=1 // pred_region
      %s10 = ssub.s32 256, 256
      %11 = vsyncadd [#allocation5], %s10
      %s13 = sshll.u32 [#allocation4], 4
      %s14 = int_to_ptr.vmem [resolvable:$true] %s13
      %16 = dma.hbm_to_vmem [thread:$0]  %s0, 256, %s14, [#allocation5]
    $region5: #{tpu_custom_call.1} parent=1 // pred_fallthru
      _
    // Predicated region
    $region6: #{tpu_custom_call.1} parent=1 // pred_check
      _
    $region7: #{tpu_custom_call.1} parent=1 // pred_check_branch
      %18 = sbr.rel (0) target = $region9
    $region8: #{tpu_custom_call.1} parent=1 // pred_region
      %19 = dma.done [#allocation5], 256
    $region9: #{tpu_custom_call.1} parent=1 // pred_fallthru
      _
    %p20 = scmp.eq.s32.totalorder 0, 0
    // Predicated region
    $region10: #{tpu_custom_call.1} parent=1 // pred_check
      %p21 = pneg %p20
    $region11: #{tpu_custom_call.1} parent=1 // pred_check_branch
      %23 = sbr.rel (%p21) target = $region13
    $region12: #{tpu_custom_call.1} parent=1 // pred_region
      %vm24 = vcmask 7168
      %25 = vst.msk [vmem:[#allocation2] sm:$0xff] %vm24, -inf
      %26 = vst.msk [vmem:[#allocation3] sm:$0xff] %vm24, 0.0
    $region13: #{tpu_custom_call.1} parent=1 // pred_fallthru
      _
    %v27 = vld [vmem:[#allocation4] sm:$0xff]
    %v28 = vld [vmem:[#allocation4 + $0x8] sm:$0xff]
    %v29 = vld [vmem:[#allocation2] sm:$0xff]
    %v30 = vmax.f32 %v27, %v28
    %31 = vmax.xlane.f32.xlu0 %v30
    %v32 = vpop.xlane.xlu0 %31
    %v33 = vmax.f32 %v29, %v32
    %vm34 = vcmask 7168
    %35 = vst.msk [vmem:[#allocation2] sm:$0xff] %vm34, %v33
    %v36 = vld [vmem:[#allocation3] sm:$0xff]
    %v37 = vadd.f32 %v27, %v28
    %38 = vadd.xlane.f32.xlu0 %v37
    %v39 = vpop.xlane.xlu0 %38
    %v40 = vadd.f32 %v36, %v39
    %41 = vst.msk [vmem:[#allocation3] sm:$0xff] %vm34, %v40
    // Predicated region
    $region14: #{tpu_custom_call.1} parent=1 // pred_check
      %p42 = pneg %p20
    $region15: #{tpu_custom_call.1} parent=1 // pred_check_branch
      %44 = sbr.rel (%p42) target = $region17
    $region16: #{tpu_custom_call.1} parent=1 // pred_region
      %v45 = vld [vmem:[#allocation2] sm:$0xff]
      %46 = vst.msk [vmem:[%s1] sm:$0xff] %vm34, %v45
      %v47 = vld [vmem:[#allocation3] sm:$0xff]
      %v48 = vmul.f32 %v47, 0.00390625
      %50 = vrot.lane.b32.xlu0 %v48, 1
      %v51 = vpop.permute.xlu0 %50
      %vm53 = vcmask 15368
      %54 = vst.msk [vmem:[%s1] sm:$0xff] %vm53, %v51
    $region17: #{tpu_custom_call.1} parent=1 // pred_fallthru
      _
    // Predicated region
    $region18: #{tpu_custom_call.1} parent=1 // pred_check
      _
    $region19: #{tpu_custom_call.1} parent=1 // pred_check_branch
      %56 = sbr.rel (0) target = $region21
    $region20: #{tpu_custom_call.1} parent=1 // pred_region
      _
    $region21: #{tpu_custom_call.1} parent=1 // pred_fallthru
      _
    // Predicated region
    $region22: #{tpu_custom_call.1} parent=1 // pred_check
      _
    $region23: #{tpu_custom_call.1} parent=1 // pred_check_branch
      %58 = sbr.rel (0) target = $region25
    $region24: #{tpu_custom_call.1} parent=1 // pred_region
      _
    $region25: #{tpu_custom_call.1} parent=1 // pred_fallthru
      _
    %59 = vsyncpa [#allocation5], 1

</llo_original>
